<compile_context>
chip_gen: v7x
topology: tpu7x:2x2x1
jax: 0.10.0
libtpu: 0.0.40
codegen_flags: <defaults>
</compile_context>

<pallas_src>
import functools

import jax
import jax.numpy as jnp
import numpy as np
from jax.experimental import pallas as pl
from jax.experimental.pallas import tpu as pltpu

K = 7           # conv kernel size
PAD = K // 2    # same-padding


def _round_up(x: int, m: int) -> int:
    return -(-x // m) * m


# ----------------------------------------------------------------------------
# Host-side (trace-time) precompute
# ----------------------------------------------------------------------------
def _tap_masks(H: int, W: int, hw_pad: int) -> np.ndarray:
    """(K*K, hw_pad) 0/1 masks: output pixels whose (di,dj)-shifted source is in-bounds."""
    m = np.zeros((K * K, H, W), np.float32)
    for i in range(K):
        for j in range(K):
            di, dj = i - PAD, j - PAD
            h0, h1 = max(0, -di), min(H, H - di)
            w0, w1 = max(0, -dj), min(W, W - dj)
            m[i * K + j, h0:h1, w0:w1] = 1.0
    m = m.reshape(K * K, H * W)
    if hw_pad > H * W:
        m = np.pad(m, ((0, 0), (0, hw_pad - H * W)))
    return m


def _band_matrices(w2: np.ndarray, H: int, W: int, hw_pad: int) -> np.ndarray:
    """(2, hw_pad, hw_pad) banded matrices so that conv(cat(avg,max)) = sum@A[0] + max@A[1].

    w2: (2, K, K), row 0 (avg taps) already scaled by 1/C (mean fold).
    """
    HW = H * W
    A = np.zeros((2, hw_pad, hw_pad), np.float32)
    p = np.arange(HW)
    ph, pw = p // W, p % W
    for i in range(K):
        for j in range(K):
            sh, sw = ph + (i - PAD), pw + (j - PAD)
            ok = (sh >= 0) & (sh < H) & (sw >= 0) & (sw < W)
            q = (sh * W + sw)[ok]
            A[0, q, p[ok]] += w2[0, i, j]
            A[1, q, p[ok]] += w2[1, i, j]
    return A


# ----------------------------------------------------------------------------
# Kernels
# ----------------------------------------------------------------------------
def _accumulate_channels(x_ref, sum_sc, max_sc):
    """Running channel sum/max across the trailing 'arbitrary' C grid axis."""
    c = pl.program_id(1)
    x = x_ref[...].astype(jnp.float32)        # native dtype in HBM, f32 in vregs
    part_sum = jnp.sum(x, axis=1)             # (NB, HWp)
    part_max = jnp.max(x, axis=1)             # (NB, HWp)

    @pl.when(c == 0)
    def _():
        sum_sc[...] = part_sum
        max_sc[...] = part_max

    @pl.when(c > 0)
    def _():
        sum_sc[...] = sum_sc[...] + part_sum
        max_sc[...] = jnp.maximum(max_sc[...], part_max)


def _sam_mxu_kernel(x_ref, a_ref, o_ref, sum_sc, max_sc):
    # x_ref: (NB, BC, HWp) native dtype; a_ref: (2, HWp, HWp) f32 banded matrices
    # o_ref: (NB, HWp); sum_sc/max_sc: (NB, HWp) f32 scratch accumulators
    _accumulate_channels(x_ref, sum_sc, max_sc)

    @pl.when(pl.program_id(1) == pl.num_programs(1) - 1)
    def _():
        # 1/C and the zero-padding masks are folded into A; conv rides the MXU.
        y = jnp.dot(sum_sc[...], a_ref[0], preferred_element_type=jnp.float32)
        y = y + jnp.dot(max_sc[...], a_ref[1], preferred_element_type=jnp.float32)
        o_ref[...] = jax.nn.sigmoid(y).astype(o_ref.dtype)


def _sam_roll_kernel(w_ref, x_ref, m_ref, o_ref, sum_sc, max_sc, *, img_w: int):
    # w_ref: SMEM (2, K*K) scalar weights (row 0 already scaled by 1/C)
    # m_ref: (K*K, HWp) shared 0/1 valid-masks
    _accumulate_channels(x_ref, sum_sc, max_sc)

    @pl.when(pl.program_id(1) == pl.num_programs(1) - 1)
    def _():
        avg = sum_sc[...]            # mean fold: 1/C is inside w_ref[0, :]
        mx = max_sc[...]
        hw_pad = avg.shape[-1]
        masks = m_ref[...]           # (K*K, HWp), loaded once
        acc = jnp.zeros_like(avg)
        for i in range(K):
            for j in range(K):
                di, dj = i - PAD, j - PAD
                t = i * K + j
                # out[p] needs plane[p + di*W + dj]; roll wraps, masks zero the
                # wrapped / out-of-image positions (valid taps never touch the
                # lane-padding region, so padding HW is safe).
                shift = (-(di * img_w + dj)) % hw_pad
                ra = avg if shift == 0 else pltpu.roll(avg, shift, axis=1)
                rm = mx if shift == 0 else pltpu.roll(mx, shift, axis=1)
                acc = acc + (ra * w_ref[0, t] + rm * w_ref[1, t]) * masks[t:t + 1, :]
        o_ref[...] = jax.nn.sigmoid(acc).astype(o_ref.dtype)


# ----------------------------------------------------------------------------
# Block-size policy (generation aware)
# ----------------------------------------------------------------------------
def _vmem_limit_bytes() -> int:
    cap = 64 << 20                                  # conservative fallback (v7x)
    try:
        cap = int(pltpu.get_tpu_info().vmem_capacity_bytes)
    except Exception:
        pass
    # ~75% of physical, capped: ~96-100 MiB on v5e/v6e (128 MiB), ~48 MiB on v7x (64 MiB).
    return int(max(32 << 20, min(cap * 3 // 4, 100 << 20)))


def _pick_block_n(N: int) -> int:
    """Small batch blocks: register-resident planes + several pipelined grid steps."""
    if N <= 8:
        return N            # full (tiny) batch; output block equals full dim
    if N <= 64:
        return 8
    if N <= 256:
        return 16
    return 32


def _pick_block_c(C: int, block_n: int, hw_pad: int, itemsize: int, x_budget: int) -> int:
    """Largest channel block (full C, or a multiple-of-8 divisor of C) fitting the budget."""
    per_c = 2 * block_n * hw_pad * itemsize        # double-buffered bytes per channel
    max_c = max(1, x_budget // per_c)
    if C <= max_c:
        return C
    d = min((max_c // 8) * 8, (C // 8) * 8)
    while d >= 8:
        if C % d == 0:
            return d
        d -= 8
    return C   # TODO(synk): pad C (zeros for sum, -inf for max) instead of full-C fallback


# ----------------------------------------------------------------------------
# Wrapper
# ----------------------------------------------------------------------------
def spatial_attention_extractor(x, weight, *, block_n=None, block_c=None, conv_impl="auto"):
    """x: (N, C, H, W) any float dtype; weight: (1, 2, K, K) (PyTorch OIHW).

    Returns sigmoid(conv7x7(cat(mean_C(x), max_C(x)))) with shape (N, 1, H, W).
    Note: weight preprocessing happens on the host (numpy); call with concrete
    arrays (do it once outside the hot loop).
    """
    N, C, H, W = x.shape
    HW = H * W
    hw_pad = _round_up(max(HW, 128), 128)          # lane-dense output slab
    itemsize = jnp.dtype(x.dtype).itemsize

    vmem_limit = _vmem_limit_bytes()
    if block_n is None:
        block_n = _pick_block_n(N)
    if block_c is None:
        block_c = _pick_block_c(C, block_n, hw_pad, itemsize, vmem_limit // 2)
    n_pad = _round_up(N, block_n)

    if conv_impl == "auto":
        # MXU banded-matmul conv when both (HWp, HWp) matrices fit comfortably.
        conv_impl = "mxu" if hw_pad <= 512 else "roll"

    # Lane-dense, padded input view in its *native* dtype (no wrapper upcast pass).
    x_flat = x.reshape(N, C, HW)
    if n_pad != N or hw_pad != HW:
        x_flat = jnp.pad(x_flat, ((0, n_pad - N), (0, 0), (0, hw_pad - HW)))

    # Mean fold: kernel computes a channel *sum*; 1/C goes into the avg-tap weights.
    w2 = np.asarray(weight, dtype=np.float32).reshape(2, K, K).copy()
    w2[0] *= 1.0 / float(C)

    grid = (n_pad // block_n, C // block_c)
    x_spec = pl.BlockSpec((block_n, block_c, hw_pad), lambda n, c: (n, c, 0))
    out_spec = pl.BlockSpec((block_n, hw_pad), lambda n, c: (n, 0))
    out_shape = jax.ShapeDtypeStruct((n_pad, hw_pad), x.dtype)
    scratch = [pltpu.VMEM((block_n, hw_pad), jnp.float32),   # running channel sum
               pltpu.VMEM((block_n, hw_pad), jnp.float32)]   # running channel max
    cparams = pltpu.CompilerParams(
        dimension_semantics=("parallel", "arbitrary"),
        vmem_limit_bytes=vmem_limit,
    )

    if conv_impl == "mxu":
        a_mats = jnp.asarray(_band_matrices(w2, H, W, hw_pad))
        out_flat = pl.pallas_call(
            _sam_mxu_kernel,
            out_shape=out_shape,
            grid=grid,
            in_specs=[x_spec,
                      pl.BlockSpec((2, hw_pad, hw_pad), lambda n, c: (0, 0, 0))],
            out_specs=out_spec,
            scratch_shapes=scratch,
            compiler_params=cparams,
        )(x_flat, a_mats)
    else:
        w_sm = jnp.asarray(w2.reshape(2, K * K))               # (2, 49) scalars -> SMEM
        masks = jnp.asarray(_tap_masks(H, W, hw_pad))          # (49, HWp) shared 0/1 masks
        kern = functools.partial(_sam_roll_kernel, img_w=W)
        out_flat = pl.pallas_call(
            kern,
            out_shape=out_shape,
            grid=grid,
            in_specs=[pl.BlockSpec(memory_space=pltpu.MemorySpace.SMEM),
                      x_spec,
                      pl.BlockSpec((K * K, hw_pad), lambda n, c: (0, 0))],
            out_specs=out_spec,
            scratch_shapes=scratch,
            compiler_params=cparams,
        )(w_sm, x_flat, masks)

    return out_flat[:N, :HW].reshape(N, 1, H, W)


# ----------------------------------------------------------------------------
# Pure-JAX reference (matches the PyTorch module)
# ----------------------------------------------------------------------------
def reference_forward(x, weight):
    avg = jnp.mean(x, axis=1, keepdims=True)
    mx = jnp.max(x, axis=1, keepdims=True)
    cat = jnp.concatenate([avg, mx], axis=1)
    y = jax.lax.conv_general_dilated(
        cat, weight, window_strides=(1, 1),
        padding=[(PAD, PAD), (PAD, PAD)],
        dimension_numbers=("NCHW", "OIHW", "NCHW"),
    )
    return jax.nn.sigmoid(y)


if __name__ == "__main__":
    key = jax.random.PRNGKey(0)
    kx, kw = jax.random.split(key)

    # Small shapes consistent with the module's forward.
    N, C, H, W = 2, 4, 16, 16
    x = jax.random.normal(kx, (N, C, H, W), dtype=jnp.float32)
    # Deterministic synthetic conv weight (nn.Conv2d(2, 1, 7, bias=False) shape).
    weight = 0.1 * jax.random.normal(kw, (1, 2, K, K), dtype=jnp.float32)

    ref = jax.block_until_ready(reference_forward(x, weight))

    # Default (auto) path: MXU banded-matmul conv for this small feature map.
    # Tolerance allows for MXU f32 multi-pass / bf16-pass rounding; the roll
    # path below pins exact f32 agreement with the reference.
    out = jax.block_until_ready(spatial_attention_extractor(x, weight))
    assert out.shape == (N, 1, H, W)
    np.testing.assert_allclose(np.asarray(out), np.asarray(ref), atol=3e-3, rtol=1e-4)

    # Roll/shift path (used for large feature maps): exact f32 VALU/XLU math.
    out_roll = jax.block_until_ready(
        spatial_attention_extractor(x, weight, conv_impl="roll"))
    np.testing.assert_allclose(np.asarray(out_roll), np.asarray(ref), atol=1e-5, rtol=1e-5)

    print("KERNEL_OK")
</pallas_src>

<mosaic_0001>
module attributes {stable_mosaic.version = 11 : i64} {
  func.func @_sam_mxu_kernel(%arg0: i32, %arg1: i32, %arg2: memref<2x4x256xf32, #tpu.memory_space<vmem>>, %arg3: memref<2x256x256xf32, #tpu.memory_space<vmem>>, %arg4: memref<2x256xf32, #tpu.memory_space<vmem>>, %arg5: memref<2x256xf32, #tpu.memory_space<vmem>>, %arg6: memref<2x256xf32, #tpu.memory_space<vmem>>) attributes {dimension_semantics = [#tpu.dimension_semantics<parallel>, #tpu.dimension_semantics<arbitrary>], iteration_bounds = array<i64: 1, 1>, scalar_prefetch = 0 : i64, scratch_operands = 2 : i64, tpu.core_type = #tpu.core_type<tc>, window_params = [{transform_indices = @transform_0, window_bounds = array<i64: 2, 4, 256>}, {pipeline_mode = #tpu.pipeline_mode<synchronous>, transform_indices = @transform_1, window_bounds = array<i64: 2, 256, 256>}, {transform_indices = @transform_2, window_bounds = array<i64: 2, 256>}]} {
    %c0 = arith.constant 0 : index
    %c0_0 = arith.constant 0 : index
    %c0_1 = arith.constant 0 : index
    %0 = vector.load %arg2[%c0, %c0_0, %c0_1] : memref<2x4x256xf32, #tpu.memory_space<vmem>>, vector<2x4x256xf32>
    %cst = arith.constant dense<0.000000e+00> : vector<2x256xf32>
    %1 = vector.multi_reduction <add>, %0, %cst [1] : vector<2x4x256xf32> to vector<2x256xf32>
    %cst_2 = arith.constant dense<0xFF800000> : vector<2x256xf32>
    %2 = vector.multi_reduction <maximumf>, %0, %cst_2 [1] : vector<2x4x256xf32> to vector<2x256xf32>
    %c0_i32 = arith.constant 0 : i32
    %3 = arith.cmpi eq, %arg1, %c0_i32 : i32
    %4 = arith.extui %3 : i1 to i32
    %c0_i32_3 = arith.constant 0 : i32
    %5 = arith.cmpi ne, %4, %c0_i32_3 : i32
    scf.if %5 {
      %c0_8 = arith.constant 0 : index
      %c0_9 = arith.constant 0 : index
      %12 = vector.load %arg5[%c0_8, %c0_9] : memref<2x256xf32, #tpu.memory_space<vmem>>, vector<2x256xf32>
      tpu.vector_store %arg5[%c0_8, %c0_9], %1 {strides = array<i32>} : memref<2x256xf32, #tpu.memory_space<vmem>>, vector<2x256xf32>,
      %c0_10 = arith.constant 0 : index
      %c0_11 = arith.constant 0 : index
      %13 = vector.load %arg6[%c0_10, %c0_11] : memref<2x256xf32, #tpu.memory_space<vmem>>, vector<2x256xf32>
      tpu.vector_store %arg6[%c0_10, %c0_11], %2 {strides = array<i32>} : memref<2x256xf32, #tpu.memory_space<vmem>>, vector<2x256xf32>,
    } else {
    }
    %c0_i32_4 = arith.constant 0 : i32
    %6 = arith.cmpi sgt, %arg1, %c0_i32_4 : i32
    %7 = arith.extui %6 : i1 to i32
    %c0_i32_5 = arith.constant 0 : i32
    %8 = arith.cmpi ne, %7, %c0_i32_5 : i32
    scf.if %8 {
      %c0_8 = arith.constant 0 : index
      %c0_9 = arith.constant 0 : index
      %12 = vector.load %arg5[%c0_8, %c0_9] : memref<2x256xf32, #tpu.memory_space<vmem>>, vector<2x256xf32>
      %13 = arith.addf %12, %1 : vector<2x256xf32>
      %c0_10 = arith.constant 0 : index
      %c0_11 = arith.constant 0 : index
      %14 = vector.load %arg5[%c0_10, %c0_11] : memref<2x256xf32, #tpu.memory_space<vmem>>, vector<2x256xf32>
      tpu.vector_store %arg5[%c0_10, %c0_11], %13 {strides = array<i32>} : memref<2x256xf32, #tpu.memory_space<vmem>>, vector<2x256xf32>,
      %c0_12 = arith.constant 0 : index
      %c0_13 = arith.constant 0 : index
      %15 = vector.load %arg6[%c0_12, %c0_13] : memref<2x256xf32, #tpu.memory_space<vmem>>, vector<2x256xf32>
      %16 = arith.maximumf %15, %2 : vector<2x256xf32>
      %c0_14 = arith.constant 0 : index
      %c0_15 = arith.constant 0 : index
      %17 = vector.load %arg6[%c0_14, %c0_15] : memref<2x256xf32, #tpu.memory_space<vmem>>, vector<2x256xf32>
      tpu.vector_store %arg6[%c0_14, %c0_15], %16 {strides = array<i32>} : memref<2x256xf32, #tpu.memory_space<vmem>>, vector<2x256xf32>,
    } else {
    }
    %c0_i32_6 = arith.constant 0 : i32
    %9 = arith.cmpi eq, %arg1, %c0_i32_6 : i32
    %10 = arith.extui %9 : i1 to i32
    %c0_i32_7 = arith.constant 0 : i32
    %11 = arith.cmpi ne, %10, %c0_i32_7 : i32
    scf.if %11 {
      %c0_8 = arith.constant 0 : index
      %c0_9 = arith.constant 0 : index
      %12 = vector.load %arg5[%c0_8, %c0_9] : memref<2x256xf32, #tpu.memory_space<vmem>>, vector<2x256xf32>
      %c0_10 = arith.constant 0 : index
      %c0_11 = arith.constant 0 : index
      %c0_12 = arith.constant 0 : index
      %13 = vector.load %arg3[%c0_10, %c0_11, %c0_12] : memref<2x256x256xf32, #tpu.memory_space<vmem>>, vector<1x256x256xf32>
      %14 = vector.shape_cast %13 : vector<1x256x256xf32> to vector<256x256xf32>
      %cst_13 = arith.constant dense<0.000000e+00> : vector<2x256xf32>
      %15 = tpu.matmul %12, %14, %cst_13 {dimension_numbers = #tpu.dot_dimension_numbers<[1], [0], [0], [1], [0, 0, 1, 1], [], []>} : vector<2x256xf32>, vector<256x256xf32>, vector<2x256xf32> -> vector<2x256xf32>
      %c0_14 = arith.constant 0 : index
      %c0_15 = arith.constant 0 : index
      %16 = vector.load %arg6[%c0_14, %c0_15] : memref<2x256xf32, #tpu.memory_space<vmem>>, vector<2x256xf32>
      %c1 = arith.constant 1 : index
      %c0_16 = arith.constant 0 : index
      %c0_17 = arith.constant 0 : index
      %17 = vector.load %arg3[%c1, %c0_16, %c0_17] : memref<2x256x256xf32, #tpu.memory_space<vmem>>, vector<1x256x256xf32>
      %18 = vector.shape_cast %17 : vector<1x256x256xf32> to vector<256x256xf32>
      %cst_18 = arith.constant dense<0.000000e+00> : vector<2x256xf32>
      %19 = tpu.matmul %16, %18, %cst_18 {dimension_numbers = #tpu.dot_dimension_numbers<[1], [0], [0], [1], [0, 0, 1, 1], [], []>} : vector<2x256xf32>, vector<256x256xf32>, vector<2x256xf32> -> vector<2x256xf32>
      %20 = arith.addf %15, %19 : vector<2x256xf32>
      %21 = arith.negf %20 : vector<2x256xf32>
      %22 = math.exp %21 : vector<2x256xf32>
      %cst_19 = arith.constant 1.000000e+00 : f32
      %23 = vector.broadcast %cst_19 : f32 to vector<2x256xf32>
      %24 = arith.addf %23, %22 : vector<2x256xf32>
      %25 = arith.divf %23, %24 : vector<2x256xf32>
      %c0_20 = arith.constant 0 : index
      %c0_21 = arith.constant 0 : index
      %26 = vector.load %arg4[%c0_20, %c0_21] : memref<2x256xf32, #tpu.memory_space<vmem>>, vector<2x256xf32>
      tpu.vector_store %arg4[%c0_20, %c0_21], %25 {strides = array<i32>} : memref<2x256xf32, #tpu.memory_space<vmem>>, vector<2x256xf32>,
    } else {
    }
    return
  }
  func.func @transform_0(%arg0: i32, %arg1: i32) -> (i32, i32, i32) {
    %c0_i32 = arith.constant 0 : i32
    %c0_i32_0 = arith.constant 0 : i32
    return %arg0, %arg1, %c0_i32 : i32, i32, i32
  }
  func.func @transform_1(%arg0: i32, %arg1: i32) -> (i32, i32, i32) {
    %c0_i32 = arith.constant 0 : i32
    %c0_i32_0 = arith.constant 0 : i32
    %c0_i32_1 = arith.constant 0 : i32
    %c0_i32_2 = arith.constant 0 : i32
    return %c0_i32, %c0_i32_0, %c0_i32_1 : i32, i32, i32
  }
  func.func @transform_2(%arg0: i32, %arg1: i32) -> (i32, i32) {
    %c0_i32 = arith.constant 0 : i32
    %c0_i32_0 = arith.constant 0 : i32
    return %arg0, %c0_i32 : i32, i32
  }
}

</mosaic_0001>

<llo_original>
// kernel: tpu_custom_call.1
$region0: #{tpu_custom_call.1}
  #allocation0 [shape = 'u32[]', space=smem, size = 0x4, offset = 0x4, fixed_abs, tag = 'smem constant byte address 0x4 - core index']
  #allocation1 [shape = 'u32[144,128]{1,0:T(1,128)}', space=vmem, size = 0x12000, scoped, tag = 'internal scratch']
  #allocation2 [shape = 'f32[2,256]{1,0:T(2,128)}', space=vmem, size = 0x800, scoped, tag = 'scratch operand']
  #allocation3 [shape = 'f32[2,256]{1,0:T(2,128)}', space=vmem, size = 0x800, scoped, tag = 'scratch operand']
  %s0 = inlined_call_operand.hbm [shape: f32[2,4,256], index: 0, kind: input, shape index: {}]
  %s1 = inlined_call_operand.hbm [shape: f32[2,256,256], index: 1, kind: input, shape index: {}]
  %s2 = inlined_call_operand.hbm [shape: f32[2,256], index: 2, kind: output, shape index: {}]
  %s3 = sld [smem:[#allocation0]]
  $region38: #{tpu_custom_call.1} parent=0
    _
  %s5 = ssub.s32 1, %s3
  %s6 = scalar_select 0, %s5, %s3
  $region1: #{tpu_custom_call.1} parent=0
    #allocation4 [shape = 'u8[8192]{0}', space=vmem, size = 0x2000, scoped, tag = 'input window, operand 0, single buffered']
    #allocation5 [shape = 's32[1]{0}', space=sflag, size = 0x4, scoped, tag = 'scoped memory for tpu_custom_call.1']
    #allocation6 [shape = 's32[1]{0}', space=sflag, size = 0x4, scoped, tag = 'scoped memory for tpu_custom_call.1']
    #allocation7 [shape = 'u8[524288]{0}', space=vmem, size = 0x80000, scoped, tag = 'input window, operand 1, single buffered']
    #allocation8 [shape = 's32[1]{0}', space=sflag, size = 0x4, scoped, tag = 'scoped memory for tpu_custom_call.1']
    #allocation9 [shape = 'u8[2048]{0}', space=vmem, size = 0x800, scoped, tag = 'output window, operand 0, single buffered']
    %7 = vsyncpa [#allocation5], 0
    %8 = vsyncpa [#allocation8], 0
    %9 = vsyncpa [#allocation6], 0
    // Predicated region
    $region2: #{tpu_custom_call.1} parent=1 // pred_check
      _
    $region3: #{tpu_custom_call.1} parent=1 // pred_check_branch
      %11 = sbr.rel (0) target = $region5
    $region4: #{tpu_custom_call.1} parent=1 // pred_region
      %s13 = ssub.s32 256, 256
      %14 = vsyncadd [#allocation5], %s13
      %s15 = sshll.u32 [#allocation4], 4
      %s16 = int_to_ptr.vmem [resolvable:$true] %s15
      %21 = dma.hbm_to_vmem [thread:$0]  %s0, 256, %s16, [#allocation5], 128, 128, 8
    $region5: #{tpu_custom_call.1} parent=1 // pred_fallthru
      _
    // Predicated region
    $region6: #{tpu_custom_call.1} parent=1 // pred_check
      _
    $region7: #{tpu_custom_call.1} parent=1 // pred_check_branch
      %23 = sbr.rel (0) target = $region9
    $region8: #{tpu_custom_call.1} parent=1 // pred_region
      %s25 = ssub.s32 16384, 16384
      %26 = vsyncadd [#allocation8], %s25
      %s27 = sshll.u32 [#allocation7], 4
      %s28 = int_to_ptr.vmem [resolvable:$true] %s27
      %33 = dma.hbm_to_vmem [thread:$0]  %s1, 16384, %s28, [#allocation8], 256, 256, 16
    $region9: #{tpu_custom_call.1} parent=1 // pred_fallthru
      _
    // Predicated region
    $region10: #{tpu_custom_call.1} parent=1 // pred_check
      _
    $region11: #{tpu_custom_call.1} parent=1 // pred_check_branch
      %35 = sbr.rel (0) target = $region13
    $region12: #{tpu_custom_call.1} parent=1 // pred_region
      %36 = dma.done [#allocation5], 256
    $region13: #{tpu_custom_call.1} parent=1 // pred_fallthru
      _
    // Predicated region
    $region14: #{tpu_custom_call.1} parent=1 // pred_check
      _
    $region15: #{tpu_custom_call.1} parent=1 // pred_check_branch
      %38 = sbr.rel (0) target = $region17
    $region16: #{tpu_custom_call.1} parent=1 // pred_region
      %39 = dma.done [#allocation8], 16384
    $region17: #{tpu_custom_call.1} parent=1 // pred_fallthru
      _
    %v40 = vld [vmem:[#allocation4] sm:$0xff]
    %v41 = vld [vmem:[#allocation4 + $0x8] sm:$0xff]
    %v44 = vcombine.high %v40, %v40
    %v45 = vcombine.high %v41, %v41
    %vm48 = vcmask 1043456
    %v49 = vsel %vm48, %v40, 0.0
    %v50 = vrot.slane %v49, 4
    %v51 = vadd.f32 %v49, %v50
    %v52 = vrot.slane %v51, 2
    %v53 = vadd.f32 %v51, %v52
    %v54 = vrot.slane %v53, 1
    %v55 = vadd.f32 %v53, %v54
    %v56 = vsel %vm48, %v44, 0.0
    %v57 = vrot.slane %v56, 4
    %v58 = vadd.f32 %v56, %v57
    %v59 = vrot.slane %v58, 2
    %v60 = vadd.f32 %v58, %v59
    %v61 = vrot.slane %v60, 1
    %v62 = vadd.f32 %v60, %v61
    %v63 = vsel %vm48, %v41, 0.0
    %v64 = vrot.slane %v63, 4
    %v65 = vadd.f32 %v63, %v64
    %v66 = vrot.slane %v65, 2
    %v67 = vadd.f32 %v65, %v66
    %v68 = vrot.slane %v67, 1
    %v69 = vadd.f32 %v67, %v68
    %v70 = vsel %vm48, %v45, 0.0
    %v71 = vrot.slane %v70, 4
    %v72 = vadd.f32 %v70, %v71
    %v73 = vrot.slane %v72, 2
    %v74 = vadd.f32 %v72, %v73
    %v75 = vrot.slane %v74, 1
    %v76 = vadd.f32 %v74, %v75
    %v77 = vsel %vm48, %v40, -inf
    %v78 = vrot.slane %v77, 4
    %v79 = vmax.f32 %v77, %v78
    %v80 = vrot.slane %v79, 2
    %v81 = vmax.f32 %v79, %v80
    %v82 = vrot.slane %v81, 1
    %v83 = vmax.f32 %v81, %v82
    %v84 = vsel %vm48, %v44, -inf
    %v85 = vrot.slane %v84, 4
    %v86 = vmax.f32 %v84, %v85
    %v87 = vrot.slane %v86, 2
    %v88 = vmax.f32 %v86, %v87
    %v89 = vrot.slane %v88, 1
    %v90 = vmax.f32 %v88, %v89
    %v91 = vsel %vm48, %v41, -inf
    %v92 = vrot.slane %v91, 4
    %v93 = vmax.f32 %v91, %v92
    %v94 = vrot.slane %v93, 2
    %v95 = vmax.f32 %v93, %v94
    %v96 = vrot.slane %v95, 1
    %v97 = vmax.f32 %v95, %v96
    %v98 = vsel %vm48, %v45, -inf
    %v99 = vrot.slane %v98, 4
    %v100 = vmax.f32 %v98, %v99
    %v101 = vrot.slane %v100, 2
    %v102 = vmax.f32 %v100, %v101
    %v103 = vrot.slane %v102, 1
    %v104 = vmax.f32 %v102, %v103
    %p105 = scmp.eq.s32.totalorder 0, 0
    // Predicated region
    $region18: #{tpu_custom_call.1} parent=1 // pred_check
      %p106 = pneg %p105
    $region19: #{tpu_custom_call.1} parent=1 // pred_check_branch
      %108 = sbr.rel (%p106) target = $region21
    $region20: #{tpu_custom_call.1} parent=1 // pred_region
      %v113 = vcombine.low %v55, %v62
      %v115 = vunpack.c.l.s4 1983009808
      %v116 = vunpack.c.0.s8 %v115
      %v117 = vlaneseq
      %v118 = vshrl.u32 %v117, 7
      %v119 = vsub.s32 %v116, %v118
      %v120 = vrot.slane %v113, %v119
      %v121 = vcombine.low %v69, %v76
      %v123 = vunpack.c.l.s4 1983009808
      %v124 = vunpack.c.0.s8 %v123
      %v125 = vlaneseq
      %v126 = vshrl.u32 %v125, 7
      %v127 = vsub.s32 %v124, %v126
      %v128 = vrot.slane %v121, %v127
      %vm129 = vcmask 1044484
      %v130 = vsel %vm129, %v120, %v120
      %vm131 = vcmask 1046534
      %v132 = vsel %vm131, %v120, %v130
      %v133 = vrot.slane %v128, 7
      %vm134 = vcmask 1041409
      %v135 = vsel %vm134, %v133, %v132
      %vm136 = vcmask 1043459
      %v137 = vsel %vm136, %v133, %v135
      %vm138 = vcmask 1045509
      %v139 = vsel %vm138, %v133, %v137
      %vm140 = vcmask 1047559
      %v141 = vsel %vm140, %v133, %v139
      %143 = vst [vmem:[#allocation2] sm:$0xf] %v141
      %v148 = vcombine.low %v83, %v90
      %v150 = vunpack.c.l.s4 1983009808
      %v151 = vunpack.c.0.s8 %v150
      %v152 = vlaneseq
      %v153 = vshrl.u32 %v152, 7
      %v154 = vsub.s32 %v151, %v153
      %v155 = vrot.slane %v148, %v154
      %v156 = vcombine.low %v97, %v104
      %v158 = vunpack.c.l.s4 1983009808
      %v159 = vunpack.c.0.s8 %v158
      %v160 = vlaneseq
      %v161 = vshrl.u32 %v160, 7
      %v162 = vsub.s32 %v159, %v161
      %v163 = vrot.slane %v156, %v162
      %v164 = vsel %vm129, %v155, %v155
      %v165 = vsel %vm131, %v155, %v164
      %v166 = vrot.slane %v163, 7
      %v167 = vsel %vm134, %v166, %v165
      %v168 = vsel %vm136, %v166, %v167
      %v169 = vsel %vm138, %v166, %v168
      %v170 = vsel %vm140, %v166, %v169
      %172 = vst [vmem:[#allocation3] sm:$0xf] %v170
    $region21: #{tpu_custom_call.1} parent=1 // pred_fallthru
      _
    %p173 = scmp.gt.s32.totalorder 0, 0
    // Predicated region
    $region22: #{tpu_custom_call.1} parent=1 // pred_check
      %p174 = pneg %p173
    $region23: #{tpu_custom_call.1} parent=1 // pred_check_branch
      %176 = sbr.rel (%p174) target = $region25
    $region24: #{tpu_custom_call.1} parent=1 // pred_region
      %v177 = vld [vmem:[#allocation2] sm:$0xf]
      %v182 = vcombine.low %v55, %v62
      %v184 = vunpack.c.l.s4 1983009808
      %v185 = vunpack.c.0.s8 %v184
      %v186 = vlaneseq
      %v187 = vshrl.u32 %v186, 7
      %v188 = vsub.s32 %v185, %v187
      %v189 = vrot.slane %v182, %v188
      %v190 = vcombine.low %v69, %v76
      %v192 = vunpack.c.l.s4 1983009808
      %v193 = vunpack.c.0.s8 %v192
      %v194 = vlaneseq
      %v195 = vshrl.u32 %v194, 7
      %v196 = vsub.s32 %v193, %v195
      %v197 = vrot.slane %v190, %v196
      %vm198 = vcmask 1044484
      %v199 = vsel %vm198, %v189, %v189
      %vm200 = vcmask 1046534
      %v201 = vsel %vm200, %v189, %v199
      %v202 = vrot.slane %v197, 7
      %vm203 = vcmask 1041409
      %v204 = vsel %vm203, %v202, %v201
      %vm205 = vcmask 1043459
      %v206 = vsel %vm205, %v202, %v204
      %vm207 = vcmask 1045509
      %v208 = vsel %vm207, %v202, %v206
      %vm209 = vcmask 1047559
      %v210 = vsel %vm209, %v202, %v208
      %v212 = vadd.f32 %v177, %v210
      %213 = vst [vmem:[#allocation2] sm:$0xf] %v212
      %v214 = vld [vmem:[#allocation3] sm:$0xf]
      %v219 = vcombine.low %v83, %v90
      %v221 = vunpack.c.l.s4 1983009808
      %v222 = vunpack.c.0.s8 %v221
      %v223 = vlaneseq
      %v224 = vshrl.u32 %v223, 7
      %v225 = vsub.s32 %v222, %v224
      %v226 = vrot.slane %v219, %v225
      %v227 = vcombine.low %v97, %v104
      %v229 = vunpack.c.l.s4 1983009808
      %v230 = vunpack.c.0.s8 %v229
      %v231 = vlaneseq
      %v232 = vshrl.u32 %v231, 7
      %v233 = vsub.s32 %v230, %v232
      %v234 = vrot.slane %v227, %v233
      %v235 = vsel %vm198, %v226, %v226
      %v236 = vsel %vm200, %v226, %v235
      %v237 = vrot.slane %v234, 7
      %v238 = vsel %vm203, %v237, %v236
      %v239 = vsel %vm205, %v237, %v238
      %v240 = vsel %vm207, %v237, %v239
      %v241 = vsel %vm209, %v237, %v240
      %v243 = vmax.f32 %v214, %v241
      %244 = vst [vmem:[#allocation3] sm:$0xf] %v243
    $region25: #{tpu_custom_call.1} parent=1 // pred_fallthru
      _
    // Predicated region
    $region26: #{tpu_custom_call.1} parent=1 // pred_check
      %p245 = pneg %p105
    $region27: #{tpu_custom_call.1} parent=1 // pred_check_branch
      %247 = sbr.rel (%p245) target = $region29
    $region28: #{tpu_custom_call.1} parent=1 // pred_region
      %v248 = vld [vmem:[#allocation2] sm:$0xf]
      %v249 = vld [vmem:[#allocation7] sm:$0xff]
      %v250 = vld [vmem:[#allocation7 + $0x8] sm:$0xff]
      %v251 = vld [vmem:[#allocation7 + $0x10] sm:$0xff]
      %v252 = vld [vmem:[#allocation7 + $0x18] sm:$0xff]
      %v253 = vld [vmem:[#allocation7 + $0x20] sm:$0xff]
      %v254 = vld [vmem:[#allocation7 + $0x28] sm:$0xff]
      %v255 = vld [vmem:[#allocation7 + $0x30] sm:$0xff]
      %v256 = vld [vmem:[#allocation7 + $0x38] sm:$0xff]
      %v257 = vld [vmem:[#allocation7 + $0x40] sm:$0xff]
      %v258 = vld [vmem:[#allocation7 + $0x48] sm:$0xff]
      %v259 = vld [vmem:[#allocation7 + $0x50] sm:$0xff]
      %v260 = vld [vmem:[#allocation7 + $0x58] sm:$0xff]
      %v261 = vld [vmem:[#allocation7 + $0x60] sm:$0xff]
      %v262 = vld [vmem:[#allocation7 + $0x68] sm:$0xff]
      %v263 = vld [vmem:[#allocation7 + $0x70] sm:$0xff]
      %v264 = vld [vmem:[#allocation7 + $0x78] sm:$0xff]
      %v265 = vld [vmem:[#allocation7 + $0x80] sm:$0xff]
      %v266 = vld [vmem:[#allocation7 + $0x88] sm:$0xff]
      %v267 = vld [vmem:[#allocation7 + $0x90] sm:$0xff]
      %v268 = vld [vmem:[#allocation7 + $0x98] sm:$0xff]
      %v269 = vld [vmem:[#allocation7 + $0xa0] sm:$0xff]
      %v270 = vld [vmem:[#allocation7 + $0xa8] sm:$0xff]
      %v271 = vld [vmem:[#allocation7 + $0xb0] sm:$0xff]
      %v272 = vld [vmem:[#allocation7 + $0xb8] sm:$0xff]
      %v273 = vld [vmem:[#allocation7 + $0xc0] sm:$0xff]
      %v274 = vld [vmem:[#allocation7 + $0xc8] sm:$0xff]
      %v275 = vld [vmem:[#allocation7 + $0xd0] sm:$0xff]
      %v276 = vld [vmem:[#allocation7 + $0xd8] sm:$0xff]
      %v277 = vld [vmem:[#allocation7 + $0xe0] sm:$0xff]
      %v278 = vld [vmem:[#allocation7 + $0xe8] sm:$0xff]
      %v279 = vld [vmem:[#allocation7 + $0xf0] sm:$0xff]
      %v280 = vld [vmem:[#allocation7 + $0xf8] sm:$0xff]
      %v281 = vld [vmem:[#allocation7 + $0x100] sm:$0xff]
      %v282 = vld [vmem:[#allocation7 + $0x108] sm:$0xff]
      %v283 = vld [vmem:[#allocation7 + $0x110] sm:$0xff]
      %v284 = vld [vmem:[#allocation7 + $0x118] sm:$0xff]
      %v285 = vld [vmem:[#allocation7 + $0x120] sm:$0xff]
      %v286 = vld [vmem:[#allocation7 + $0x128] sm:$0xff]
      %v287 = vld [vmem:[#allocation7 + $0x130] sm:$0xff]
      %v288 = vld [vmem:[#allocation7 + $0x138] sm:$0xff]
      %v289 = vld [vmem:[#allocation7 + $0x140] sm:$0xff]
      %v290 = vld [vmem:[#allocation7 + $0x148] sm:$0xff]
      %v291 = vld [vmem:[#allocation7 + $0x150] sm:$0xff]
      %v292 = vld [vmem:[#allocation7 + $0x158] sm:$0xff]
      %v293 = vld [vmem:[#allocation7 + $0x160] sm:$0xff]
      %v294 = vld [vmem:[#allocation7 + $0x168] sm:$0xff]
      %v295 = vld [vmem:[#allocation7 + $0x170] sm:$0xff]
      %v296 = vld [vmem:[#allocation7 + $0x178] sm:$0xff]
      %v297 = vld [vmem:[#allocation7 + $0x180] sm:$0xff]
      %v298 = vld [vmem:[#allocation7 + $0x188] sm:$0xff]
      %v299 = vld [vmem:[#allocation7 + $0x190] sm:$0xff]
      %v300 = vld [vmem:[#allocation7 + $0x198] sm:$0xff]
      %v301 = vld [vmem:[#allocation7 + $0x1a0] sm:$0xff]
      %v302 = vld [vmem:[#allocation7 + $0x1a8] sm:$0xff]
      %v303 = vld [vmem:[#allocation7 + $0x1b0] sm:$0xff]
      %v304 = vld [vmem:[#allocation7 + $0x1b8] sm:$0xff]
      %v305 = vld [vmem:[#allocation7 + $0x1c0] sm:$0xff]
      %v306 = vld [vmem:[#allocation7 + $0x1c8] sm:$0xff]
      %v307 = vld [vmem:[#allocation7 + $0x1d0] sm:$0xff]
      %v308 = vld [vmem:[#allocation7 + $0x1d8] sm:$0xff]
      %v309 = vld [vmem:[#allocation7 + $0x1e0] sm:$0xff]
      %v310 = vld [vmem:[#allocation7 + $0x1e8] sm:$0xff]
      %v311 = vld [vmem:[#allocation7 + $0x1f0] sm:$0xff]
      %v312 = vld [vmem:[#allocation7 + $0x1f8] sm:$0xff]
      %v313 = vld [vmem:[#allocation3] sm:$0xf]
      %s314 = scalar_lea.vmem [#allocation7], 512
      %v315 = vld [vmem:[%s314] sm:$0xff]
      %v316 = vld [vmem:[%s314 + $0x8] sm:$0xff]
      %v317 = vld [vmem:[%s314 + $0x10] sm:$0xff]
      %v318 = vld [vmem:[%s314 + $0x18] sm:$0xff]
      %v319 = vld [vmem:[%s314 + $0x20] sm:$0xff]
      %v320 = vld [vmem:[%s314 + $0x28] sm:$0xff]
      %v321 = vld [vmem:[%s314 + $0x30] sm:$0xff]
      %v322 = vld [vmem:[%s314 + $0x38] sm:$0xff]
      %v323 = vld [vmem:[%s314 + $0x40] sm:$0xff]
      %v324 = vld [vmem:[%s314 + $0x48] sm:$0xff]
      %v325 = vld [vmem:[%s314 + $0x50] sm:$0xff]
      %v326 = vld [vmem:[%s314 + $0x58] sm:$0xff]
      %v327 = vld [vmem:[%s314 + $0x60] sm:$0xff]
      %v328 = vld [vmem:[%s314 + $0x68] sm:$0xff]
      %v329 = vld [vmem:[%s314 + $0x70] sm:$0xff]
      %v330 = vld [vmem:[%s314 + $0x78] sm:$0xff]
      %v331 = vld [vmem:[%s314 + $0x80] sm:$0xff]
      %v332 = vld [vmem:[%s314 + $0x88] sm:$0xff]
      %v333 = vld [vmem:[%s314 + $0x90] sm:$0xff]
      %v334 = vld [vmem:[%s314 + $0x98] sm:$0xff]
      %v335 = vld [vmem:[%s314 + $0xa0] sm:$0xff]
      %v336 = vld [vmem:[%s314 + $0xa8] sm:$0xff]
      %v337 = vld [vmem:[%s314 + $0xb0] sm:$0xff]
      %v338 = vld [vmem:[%s314 + $0xb8] sm:$0xff]
      %v339 = vld [vmem:[%s314 + $0xc0] sm:$0xff]
      %v340 = vld [vmem:[%s314 + $0xc8] sm:$0xff]
      %v341 = vld [vmem:[%s314 + $0xd0] sm:$0xff]
      %v342 = vld [vmem:[%s314 + $0xd8] sm:$0xff]
      %v343 = vld [vmem:[%s314 + $0xe0] sm:$0xff]
      %v344 = vld [vmem:[%s314 + $0xe8] sm:$0xff]
      %v345 = vld [vmem:[%s314 + $0xf0] sm:$0xff]
      %v346 = vld [vmem:[%s314 + $0xf8] sm:$0xff]
      %v347 = vld [vmem:[%s314 + $0x100] sm:$0xff]
      %v348 = vld [vmem:[%s314 + $0x108] sm:$0xff]
      %v349 = vld [vmem:[%s314 + $0x110] sm:$0xff]
      %v350 = vld [vmem:[%s314 + $0x118] sm:$0xff]
      %v351 = vld [vmem:[%s314 + $0x120] sm:$0xff]
      %v352 = vld [vmem:[%s314 + $0x128] sm:$0xff]
      %v353 = vld [vmem:[%s314 + $0x130] sm:$0xff]
      %v354 = vld [vmem:[%s314 + $0x138] sm:$0xff]
      %v355 = vld [vmem:[%s314 + $0x140] sm:$0xff]
      %v356 = vld [vmem:[%s314 + $0x148] sm:$0xff]
      %v357 = vld [vmem:[%s314 + $0x150] sm:$0xff]
      %v358 = vld [vmem:[%s314 + $0x158] sm:$0xff]
      %v359 = vld [vmem:[%s314 + $0x160] sm:$0xff]
      %v360 = vld [vmem:[%s314 + $0x168] sm:$0xff]
      %v361 = vld [vmem:[%s314 + $0x170] sm:$0xff]
      %v362 = vld [vmem:[%s314 + $0x178] sm:$0xff]
      %v363 = vld [vmem:[%s314 + $0x180] sm:$0xff]
      %v364 = vld [vmem:[%s314 + $0x188] sm:$0xff]
      %v365 = vld [vmem:[%s314 + $0x190] sm:$0xff]
      %v366 = vld [vmem:[%s314 + $0x198] sm:$0xff]
      %v367 = vld [vmem:[%s314 + $0x1a0] sm:$0xff]
      %v368 = vld [vmem:[%s314 + $0x1a8] sm:$0xff]
      %v369 = vld [vmem:[%s314 + $0x1b0] sm:$0xff]
      %v370 = vld [vmem:[%s314 + $0x1b8] sm:$0xff]
      %v371 = vld [vmem:[%s314 + $0x1c0] sm:$0xff]
      %v372 = vld [vmem:[%s314 + $0x1c8] sm:$0xff]
      %v373 = vld [vmem:[%s314 + $0x1d0] sm:$0xff]
      %v374 = vld [vmem:[%s314 + $0x1d8] sm:$0xff]
      %v375 = vld [vmem:[%s314 + $0x1e0] sm:$0xff]
      %v376 = vld [vmem:[%s314 + $0x1e8] sm:$0xff]
      %v377 = vld [vmem:[%s314 + $0x1f0] sm:$0xff]
      %v378 = vld [vmem:[%s314 + $0x1f8] sm:$0xff]
      %v381 = vunpack.c.l.s4 1983009808
      %v382 = vunpack.c.0.s8 %v381
      %v383 = vlaneseq
      %v384 = vshrl.u32 %v383, 7
      %v385 = vsub.s32 %v382, %v384
      %v386 = vrot.slane %v313, %v385
      %v387 = vcombine.high %v386, %v386
      %390 = vmatprep.subr.mxu0 %v316
      %391 = vmatpush1.msra.mxu0 %v315
      %392 = vmatprep.subr.mxu0 %v318
      %393 = vmatpush1.msra.mxu0 %v317
      %394 = vmatprep.subr.mxu0 %v320
      %395 = vmatpush1.msra.mxu0 %v319
      %396 = vmatprep.subr.mxu0 %v322
      %397 = vmatpush1.msra.mxu0 %v321
      %398 = vmatprep.subr.mxu0 %v324
      %399 = vmatpush1.msra.mxu0 %v323
      %400 = vmatprep.subr.mxu0 %v326
      %401 = vmatpush1.msra.mxu0 %v325
      %402 = vmatprep.subr.mxu0 %v328
      %403 = vmatpush1.msra.mxu0 %v327
      %404 = vmatprep.subr.mxu0 %v330
      %405 = vmatpush1.msra.mxu0 %v329
      %406 = vmatprep.subr.mxu0 %v332
      %407 = vmatpush1.msra.mxu0 %v331
      %408 = vmatprep.subr.mxu0 %v334
      %409 = vmatpush1.msra.mxu0 %v333
      %410 = vmatprep.subr.mxu0 %v336
      %411 = vmatpush1.msra.mxu0 %v335
      %412 = vmatprep.subr.mxu0 %v338
      %413 = vmatpush1.msra.mxu0 %v337
      %414 = vmatprep.subr.mxu0 %v340
      %415 = vmatpush1.msra.mxu0 %v339
      %416 = vmatprep.subr.mxu0 %v342
      %417 = vmatpush1.msra.mxu0 %v341
      %418 = vmatprep.subr.mxu0 %v344
      %419 = vmatpush1.msra.mxu0 %v343
      %420 = vmatprep.subr.mxu0 %v346
      %421 = vmatpush1.msra.mxu0 %v345
      %422 = vmatprep.subr.mxu0 %v348
      %423 = vmatpush1.msra.mxu0 %v347
      %424 = vmatprep.subr.mxu0 %v350
      %425 = vmatpush1.msra.mxu0 %v349
      %426 = vmatprep.subr.mxu0 %v352
      %427 = vmatpush1.msra.mxu0 %v351
      %428 = vmatprep.subr.mxu0 %v354
      %429 = vmatpush1.msra.mxu0 %v353
      %430 = vmatprep.subr.mxu0 %v356
      %431 = vmatpush1.msra.mxu0 %v355
      %432 = vmatprep.subr.mxu0 %v358
      %433 = vmatpush1.msra.mxu0 %v357
      %434 = vmatprep.subr.mxu0 %v360
      %435 = vmatpush1.msra.mxu0 %v359
      %436 = vmatprep.subr.mxu0 %v362
      %437 = vmatpush1.msra.mxu0 %v361
      %438 = vmatprep.subr.mxu0 %v364
      %439 = vmatpush1.msra.mxu0 %v363
      %440 = vmatprep.subr.mxu0 %v366
      %441 = vmatpush1.msra.mxu0 %v365
      %442 = vmatprep.subr.mxu0 %v368
      %443 = vmatpush1.msra.mxu0 %v367
      %444 = vmatprep.subr.mxu0 %v370
      %445 = vmatpush1.msra.mxu0 %v369
      %446 = vmatprep.subr.mxu0 %v372
      %447 = vmatpush1.msra.mxu0 %v371
      %448 = vmatprep.subr.mxu0 %v374
      %449 = vmatpush1.msra.mxu0 %v373
      %450 = vmatprep.subr.mxu0 %v376
      %451 = vmatpush1.msra.mxu0 %v375
      %452 = vmatprep.subr.mxu0 %v378
      %453 = vmatpush1.msra.mxu0 %v377
      %454 = vmatprep.mubr.f32.mxu0 %v387
      %455 = vmatmul.mubr.f32.gmra.mrb[0].mxu0 %v386
      %v456 = vpop.f32.mrb[0].mxu0
      %v457 = vadd.f32 0.0, %v456
      %v458 = vpop.f32.mrb[0].mxu0
      %v459 = vadd.f32 0.0, %v458
      %460 = vdwg.mxu0
      %v463 = vunpack.c.l.s4 1983009808
      %v464 = vunpack.c.0.s8 %v463
      %v465 = vlaneseq
      %v466 = vshrl.u32 %v465, 7
      %v467 = vsub.s32 %v464, %v466
      %v468 = vrot.slane %v248, %v467
      %v469 = vcombine.high %v468, %v468
      %472 = vmatprep.subr.mxu0 %v250
      %473 = vmatpush1.msra.mxu0 %v249
      %474 = vmatprep.subr.mxu0 %v252
      %475 = vmatpush1.msra.mxu0 %v251
      %476 = vmatprep.subr.mxu0 %v254
      %477 = vmatpush1.msra.mxu0 %v253
      %478 = vmatprep.subr.mxu0 %v256
      %479 = vmatpush1.msra.mxu0 %v255
      %480 = vmatprep.subr.mxu0 %v258
      %481 = vmatpush1.msra.mxu0 %v257
      %482 = vmatprep.subr.mxu0 %v260
      %483 = vmatpush1.msra.mxu0 %v259
      %484 = vmatprep.subr.mxu0 %v262
      %485 = vmatpush1.msra.mxu0 %v261
      %486 = vmatprep.subr.mxu0 %v264
      %487 = vmatpush1.msra.mxu0 %v263
      %488 = vmatprep.subr.mxu0 %v266
      %489 = vmatpush1.msra.mxu0 %v265
      %490 = vmatprep.subr.mxu0 %v268
      %491 = vmatpush1.msra.mxu0 %v267
      %492 = vmatprep.subr.mxu0 %v270
      %493 = vmatpush1.msra.mxu0 %v269
      %494 = vmatprep.subr.mxu0 %v272
      %495 = vmatpush1.msra.mxu0 %v271
      %496 = vmatprep.subr.mxu0 %v274
      %497 = vmatpush1.msra.mxu0 %v273
      %498 = vmatprep.subr.mxu0 %v276
      %499 = vmatpush1.msra.mxu0 %v275
      %500 = vmatprep.subr.mxu0 %v278
      %501 = vmatpush1.msra.mxu0 %v277
      %502 = vmatprep.subr.mxu0 %v280
      %503 = vmatpush1.msra.mxu0 %v279
      %504 = vmatprep.subr.mxu0 %v282
      %505 = vmatpush1.msra.mxu0 %v281
      %506 = vmatprep.subr.mxu0 %v284
      %507 = vmatpush1.msra.mxu0 %v283
      %508 = vmatprep.subr.mxu0 %v286
      %509 = vmatpush1.msra.mxu0 %v285
      %510 = vmatprep.subr.mxu0 %v288
      %511 = vmatpush1.msra.mxu0 %v287
      %512 = vmatprep.subr.mxu0 %v290
      %513 = vmatpush1.msra.mxu0 %v289
      %514 = vmatprep.subr.mxu0 %v292
      %515 = vmatpush1.msra.mxu0 %v291
      %516 = vmatprep.subr.mxu0 %v294
      %517 = vmatpush1.msra.mxu0 %v293
      %518 = vmatprep.subr.mxu0 %v296
      %519 = vmatpush1.msra.mxu0 %v295
      %520 = vmatprep.subr.mxu0 %v298
      %521 = vmatpush1.msra.mxu0 %v297
      %522 = vmatprep.subr.mxu0 %v300
      %523 = vmatpush1.msra.mxu0 %v299
      %524 = vmatprep.subr.mxu0 %v302
      %525 = vmatpush1.msra.mxu0 %v301
      %526 = vmatprep.subr.mxu0 %v304
      %527 = vmatpush1.msra.mxu0 %v303
      %528 = vmatprep.subr.mxu0 %v306
      %529 = vmatpush1.msra.mxu0 %v305
      %530 = vmatprep.subr.mxu0 %v308
      %531 = vmatpush1.msra.mxu0 %v307
      %532 = vmatprep.subr.mxu0 %v310
      %533 = vmatpush1.msra.mxu0 %v309
      %534 = vmatprep.subr.mxu0 %v312
      %535 = vmatpush1.msra.mxu0 %v311
      %536 = vmatprep.mubr.f32.mxu0 %v469
      %537 = vmatmul.mubr.f32.gmra.mrb[0].mxu0 %v468
      %v538 = vpop.f32.mrb[0].mxu0
      %v539 = vadd.f32 %v457, %v538
      %v540 = vpop.f32.mrb[0].mxu0
      %v541 = vadd.f32 %v459, %v540
      %542 = vdwg.mxu0
      %v543 = vxor.u32 %v539, 2147483648
      %v544 = vxor.u32 %v541, 2147483648
      %v545 = vmul.f32 %v543, 1.442695
      %v546 = vpow.pop %v545
      %v547 = vmul.f32 %v544, 1.442695
      %v548 = vpow.pop %v547
      %v549 = vadd.f32 %v546, 1.0
      %v550 = vadd.f32 %v548, 1.0
      %v551 = vrcp.pop %v549
      %v552 = vmul.f32 1.0, %v551
      %v553 = vrcp.pop %v550
      %v554 = vmul.f32 1.0, %v553
      %v557 = vcombine.low %v552, %v554
      %v559 = vunpack.c.l.s4 1983009808
      %v560 = vunpack.c.0.s8 %v559
      %v561 = vlaneseq
      %v562 = vshrl.u32 %v561, 7
      %v563 = vsub.s32 %v560, %v562
      %v564 = vrot.slane %v557, %v563
      %566 = vst [vmem:[#allocation9] sm:$0xf] %v564
    $region29: #{tpu_custom_call.1} parent=1 // pred_fallthru
      _
    // Predicated region
    $region30: #{tpu_custom_call.1} parent=1 // pred_check
      _
    $region31: #{tpu_custom_call.1} parent=1 // pred_check_branch
      %568 = sbr.rel (0) target = $region33
    $region32: #{tpu_custom_call.1} parent=1 // pred_region
      %s570 = ssub.s32 64, 64
      %571 = vsyncadd [#allocation6], %s570
      %s573 = sshll.u32 [#allocation9], 4
      %s574 = int_to_ptr.vmem [resolvable:$true] %s573
      %576 = dma.vmem_to_hbm [thread:$0]  %s574, 64, %s2, [#allocation6]
    $region33: #{tpu_custom_call.1} parent=1 // pred_fallthru
      _
    // Predicated region
    $region34: #{tpu_custom_call.1} parent=1 // pred_check
      _
    $region35: #{tpu_custom_call.1} parent=1 // pred_check_branch
      %578 = sbr.rel (0) target = $region37
    $region36: #{tpu_custom_call.1} parent=1 // pred_region
      %579 = dma.done [#allocation6], 64
    $region37: #{tpu_custom_call.1} parent=1 // pred_fallthru
      _
    %580 = vsyncpa [#allocation5], 1
    %581 = vsyncpa [#allocation8], 1
    %582 = vsyncpa [#allocation6], 1

</llo_original>
